<compile_context>
chip_gen: v6e
topology: v6e:2x2x1
jax: 0.10.0
libtpu: 0.0.40
codegen_flags: <defaults>
</compile_context>

<pallas_src>
import jax
import jax.numpy as jnp
from jax.experimental import pallas as pl
from jax.experimental.pallas import tpu as pltpu

LANE = 128
SUBLANE = 8


def _round_up(x, m):
    return ((x + m - 1) // m) * m


def dqn_forward(state, params, *, block_b=512):
    """state: (B, state_dim) f32; params: (in,out) weights and (1,out) biases (unpadded)."""
    w1, b1 = params["w1"], params["b1"]
    w2, b2 = params["w2"], params["b2"]
    w3, b3 = params["w3"], params["b3"]

    B, state_dim = state.shape
    hidden_dim = w1.shape[1]
    action_dim = w3.shape[1]

    H = _round_up(hidden_dim, LANE)   # lane-dense hidden width
    A = _round_up(action_dim, LANE)   # lane-dense output width (unmasked stores)
    BW = max(H, A)                    # shared bias-tile width

    # Zero-pad weights to lane-dense shapes. Padded columns produce 0 pre-activation
    # (zero weight cols + zero bias), ReLU(0)=0, and zero rows of the next weight kill
    # any contribution, so semantics are identical after slicing the output.
    w1p = jnp.zeros((state_dim, H), jnp.float32).at[:, :hidden_dim].set(w1)
    w2p = jnp.zeros((H, H), jnp.float32).at[:hidden_dim, :hidden_dim].set(w2)
    w3p = jnp.zeros((H, A), jnp.float32).at[:hidden_dim, :action_dim].set(w3)

    # Single (8, BW) bias tile: row 0 = b1, row 1 = b2, row 2 = b3, rest zero.
    bias = jnp.zeros((SUBLANE, BW), jnp.float32)
    bias = bias.at[0, :hidden_dim].set(b1.reshape(-1))
    bias = bias.at[1, :hidden_dim].set(b2.reshape(-1))
    bias = bias.at[2, :action_dim].set(b3.reshape(-1))

    # Batch tiling: big tiles amortize per-step overhead; small batches just pad to a
    # sublane multiple (single grid point).
    TB = block_b if B >= block_b else _round_up(B, SUBLANE)
    B_pad = _round_up(B, TB)
    if B_pad != B:
        state = jnp.pad(state, ((0, B_pad - B), (0, 0)))
    grid = (B_pad // TB,)

    def kernel(x_ref, w1_ref, w2_ref, w3_ref, bias_ref, o_ref):
        bias_tile = bias_ref[...]
        b1_row = bias_tile[0:1, :H]
        b2_row = bias_tile[1:2, :H]
        b3_row = bias_tile[2:3, :A]
        # fc1 + ReLU (MXU matmul, f32 accumulation)
        h1 = jnp.dot(x_ref[...], w1_ref[...], preferred_element_type=jnp.float32)
        h1 = jnp.maximum(h1 + b1_row, 0.0)
        # fc2 + ReLU
        h2 = jnp.dot(h1, w2_ref[...], preferred_element_type=jnp.float32)
        h2 = jnp.maximum(h2 + b2_row, 0.0)
        # fc3 (Q-values, no activation) -> lane-dense (TB, A) store
        q = jnp.dot(h2, w3_ref[...], preferred_element_type=jnp.float32) + b3_row
        o_ref[...] = q.astype(o_ref.dtype)

    out = pl.pallas_call(
        kernel,
        out_shape=jax.ShapeDtypeStruct((B_pad, A), jnp.float32),
        grid=grid,
        in_specs=[
            pl.BlockSpec((TB, state_dim), lambda i: (i, 0)),   # streamed batch tile
            pl.BlockSpec((state_dim, H), lambda i: (0, 0)),    # VMEM-resident weights
            pl.BlockSpec((H, H), lambda i: (0, 0)),
            pl.BlockSpec((H, A), lambda i: (0, 0)),
            pl.BlockSpec((SUBLANE, BW), lambda i: (0, 0)),     # fused bias tile
        ],
        out_specs=pl.BlockSpec((TB, A), lambda i: (i, 0)),
        compiler_params=pltpu.CompilerParams(
            dimension_semantics=("parallel",),
        ),
    )(state, w1p, w2p, w3p, bias)

    # Slice away batch padding and padded Q columns BEFORE any argmax over actions.
    return out[:B, :action_dim]


def init_params(key, state_dim, action_dim, hidden_dim=64):
    """Deterministic init mimicking nn.Linear's uniform(-1/sqrt(fan_in), 1/sqrt(fan_in))."""
    ks = jax.random.split(key, 6)

    def linear(kw, kb, fan_in, fan_out):
        bound = 1.0 / jnp.sqrt(jnp.float32(fan_in))
        w = jax.random.uniform(kw, (fan_in, fan_out), jnp.float32, -bound, bound)
        b = jax.random.uniform(kb, (1, fan_out), jnp.float32, -bound, bound)
        return w, b

    w1, b1 = linear(ks[0], ks[1], state_dim, hidden_dim)
    w2, b2 = linear(ks[2], ks[3], hidden_dim, hidden_dim)
    w3, b3 = linear(ks[4], ks[5], hidden_dim, action_dim)
    return {"w1": w1, "b1": b1, "w2": w2, "b2": b2, "w3": w3, "b3": b3}


def dqn_reference(state, params):
    h1 = jnp.maximum(state @ params["w1"] + params["b1"], 0.0)
    h2 = jnp.maximum(h1 @ params["w2"] + params["b2"], 0.0)
    return h2 @ params["w3"] + params["b3"]


if __name__ == "__main__":
    key = jax.random.PRNGKey(0)
    k_param, k_state = jax.random.split(key)

    batch = 2
    state_dim = 8
    action_dim = 4
    hidden_dim = 64

    params = init_params(k_param, state_dim, action_dim, hidden_dim)
    state = jax.random.normal(k_state, (batch, state_dim), jnp.float32)

    q_values = dqn_forward(state, params)
    q_values = jax.block_until_ready(q_values)

    # Sanity check against pure-JAX reference (unpadded params).
    ref = dqn_reference(state, params)
    assert q_values.shape == (batch, action_dim)
    assert jnp.allclose(q_values, ref, atol=1e-5, rtol=1e-5), "mismatch vs reference"

    # Also exercise a larger, multi-tile batch (>= 2 grid points for v7x megacore).
    big_state = jax.random.normal(jax.random.PRNGKey(1), (1024 + 3, state_dim), jnp.float32)
    big_q = jax.block_until_ready(dqn_forward(big_state, params))
    big_ref = dqn_reference(big_state, params)
    assert big_q.shape == (1024 + 3, action_dim)
    assert jnp.allclose(big_q, big_ref, atol=1e-4, rtol=1e-4), "mismatch vs reference (big batch)"

    print("KERNEL_OK")
</pallas_src>

<mosaic_0001>
module attributes {stable_mosaic.version = 11 : i64} {
  func.func @kernel(%arg0: i32, %arg1: memref<8x8xf32, #tpu.memory_space<vmem>>, %arg2: memref<8x128xf32, #tpu.memory_space<vmem>>, %arg3: memref<128x128xf32, #tpu.memory_space<vmem>>, %arg4: memref<128x128xf32, #tpu.memory_space<vmem>>, %arg5: memref<8x128xf32, #tpu.memory_space<vmem>>, %arg6: memref<8x128xf32, #tpu.memory_space<vmem>>) attributes {dimension_semantics = [#tpu.dimension_semantics<parallel>], iteration_bounds = array<i64: 1>, scalar_prefetch = 0 : i64, scratch_operands = 0 : i64, tpu.core_type = #tpu.core_type<tc>, window_params = [{transform_indices = @transform_0, window_bounds = array<i64: 8, 8>}, {pipeline_mode = #tpu.pipeline_mode<synchronous>, transform_indices = @transform_1, window_bounds = array<i64: 8, 128>}, {pipeline_mode = #tpu.pipeline_mode<synchronous>, transform_indices = @transform_2, window_bounds = array<i64: 128, 128>}, {pipeline_mode = #tpu.pipeline_mode<synchronous>, transform_indices = @transform_3, window_bounds = array<i64: 128, 128>}, {pipeline_mode = #tpu.pipeline_mode<synchronous>, transform_indices = @transform_4, window_bounds = array<i64: 8, 128>}, {transform_indices = @transform_5, window_bounds = array<i64: 8, 128>}]} {
    %c0 = arith.constant 0 : index
    %c0_0 = arith.constant 0 : index
    %0 = vector.load %arg5[%c0, %c0_0] : memref<8x128xf32, #tpu.memory_space<vmem>>, vector<8x128xf32>
    %1 = vector.extract_strided_slice %0 {offsets = [0, 0], sizes = [1, 128], strides = [1, 1]} : vector<8x128xf32> to vector<1x128xf32>
    %2 = vector.extract_strided_slice %0 {offsets = [1, 0], sizes = [1, 128], strides = [1, 1]} : vector<8x128xf32> to vector<1x128xf32>
    %3 = vector.extract_strided_slice %0 {offsets = [2, 0], sizes = [1, 128], strides = [1, 1]} : vector<8x128xf32> to vector<1x128xf32>
    %c0_1 = arith.constant 0 : index
    %c0_2 = arith.constant 0 : index
    %4 = vector.load %arg1[%c0_1, %c0_2] : memref<8x8xf32, #tpu.memory_space<vmem>>, vector<8x8xf32>
    %c0_3 = arith.constant 0 : index
    %c0_4 = arith.constant 0 : index
    %5 = vector.load %arg2[%c0_3, %c0_4] : memref<8x128xf32, #tpu.memory_space<vmem>>, vector<8x128xf32>
    %cst = arith.constant dense<0.000000e+00> : vector<8x128xf32>
    %6 = tpu.matmul %4, %5, %cst {dimension_numbers = #tpu.dot_dimension_numbers<[1], [0], [0], [1], [0, 0, 1, 1], [], []>} : vector<8x8xf32>, vector<8x128xf32>, vector<8x128xf32> -> vector<8x128xf32>
    %7 = vector.broadcast %1 : vector<1x128xf32> to vector<8x128xf32>
    %8 = arith.addf %6, %7 : vector<8x128xf32>
    %cst_5 = arith.constant 0.000000e+00 : f32
    %9 = vector.broadcast %cst_5 : f32 to vector<8x128xf32>
    %10 = arith.maximumf %8, %9 : vector<8x128xf32>
    %c0_6 = arith.constant 0 : index
    %c0_7 = arith.constant 0 : index
    %11 = vector.load %arg3[%c0_6, %c0_7] : memref<128x128xf32, #tpu.memory_space<vmem>>, vector<128x128xf32>
    %cst_8 = arith.constant dense<0.000000e+00> : vector<8x128xf32>
    %12 = tpu.matmul %10, %11, %cst_8 {dimension_numbers = #tpu.dot_dimension_numbers<[1], [0], [0], [1], [0, 0, 1, 1], [], []>} : vector<8x128xf32>, vector<128x128xf32>, vector<8x128xf32> -> vector<8x128xf32>
    %13 = vector.broadcast %2 : vector<1x128xf32> to vector<8x128xf32>
    %14 = arith.addf %12, %13 : vector<8x128xf32>
    %cst_9 = arith.constant 0.000000e+00 : f32
    %15 = vector.broadcast %cst_9 : f32 to vector<8x128xf32>
    %16 = arith.maximumf %14, %15 : vector<8x128xf32>
    %c0_10 = arith.constant 0 : index
    %c0_11 = arith.constant 0 : index
    %17 = vector.load %arg4[%c0_10, %c0_11] : memref<128x128xf32, #tpu.memory_space<vmem>>, vector<128x128xf32>
    %cst_12 = arith.constant dense<0.000000e+00> : vector<8x128xf32>
    %18 = tpu.matmul %16, %17, %cst_12 {dimension_numbers = #tpu.dot_dimension_numbers<[1], [0], [0], [1], [0, 0, 1, 1], [], []>} : vector<8x128xf32>, vector<128x128xf32>, vector<8x128xf32> -> vector<8x128xf32>
    %19 = vector.broadcast %3 : vector<1x128xf32> to vector<8x128xf32>
    %20 = arith.addf %18, %19 : vector<8x128xf32>
    %c0_13 = arith.constant 0 : index
    %c0_14 = arith.constant 0 : index
    %21 = vector.load %arg6[%c0_13, %c0_14] : memref<8x128xf32, #tpu.memory_space<vmem>>, vector<8x128xf32>
    tpu.vector_store %arg6[%c0_13, %c0_14], %20 {strides = array<i32>} : memref<8x128xf32, #tpu.memory_space<vmem>>, vector<8x128xf32>,
    return
  }
  func.func @transform_0(%arg0: i32) -> (i32, i32) {
    %c0_i32 = arith.constant 0 : i32
    %c0_i32_0 = arith.constant 0 : i32
    return %arg0, %c0_i32 : i32, i32
  }
  func.func @transform_1(%arg0: i32) -> (i32, i32) {
    %c0_i32 = arith.constant 0 : i32
    %c0_i32_0 = arith.constant 0 : i32
    %c0_i32_1 = arith.constant 0 : i32
    return %c0_i32, %c0_i32_0 : i32, i32
  }
  func.func @transform_2(%arg0: i32) -> (i32, i32) {
    %c0_i32 = arith.constant 0 : i32
    %c0_i32_0 = arith.constant 0 : i32
    %c0_i32_1 = arith.constant 0 : i32
    return %c0_i32, %c0_i32_0 : i32, i32
  }
  func.func @transform_3(%arg0: i32) -> (i32, i32) {
    %c0_i32 = arith.constant 0 : i32
    %c0_i32_0 = arith.constant 0 : i32
    %c0_i32_1 = arith.constant 0 : i32
    return %c0_i32, %c0_i32_0 : i32, i32
  }
  func.func @transform_4(%arg0: i32) -> (i32, i32) {
    %c0_i32 = arith.constant 0 : i32
    %c0_i32_0 = arith.constant 0 : i32
    %c0_i32_1 = arith.constant 0 : i32
    return %c0_i32, %c0_i32_0 : i32, i32
  }
  func.func @transform_5(%arg0: i32) -> (i32, i32) {
    %c0_i32 = arith.constant 0 : i32
    %c0_i32_0 = arith.constant 0 : i32
    return %arg0, %c0_i32 : i32, i32
  }
}

</mosaic_0001>

<llo_original>
// kernel: tpu_custom_call.1
$region0: #{tpu_custom_call.1}
  #allocation0 [shape = 'u32[]', space=smem, size = 0x4, offset = 0x4, fixed_abs, tag = 'smem constant byte address 0x4 - core index']
  #allocation1 [shape = 'u32[144,128]{1,0:T(1,128)}', space=vmem, size = 0x12000, scoped, tag = 'internal scratch']
  %s0 = inlined_call_operand.hbm [shape: f32[8,8], index: 0, kind: input, shape index: {}]
  %s1 = inlined_call_operand.hbm [shape: f32[8,128], index: 1, kind: input, shape index: {}]
  %s2 = inlined_call_operand.hbm [shape: f32[128,128], index: 2, kind: input, shape index: {}]
  %s3 = inlined_call_operand.hbm [shape: f32[128,128], index: 3, kind: input, shape index: {}]
  %s4 = inlined_call_operand.hbm [shape: f32[8,128], index: 4, kind: input, shape index: {}]
  %s5 = inlined_call_operand.hbm [shape: f32[8,128], index: 5, kind: output, shape index: {}]
  %s6 = sld [smem:[#allocation0]]
  $region50: #{tpu_custom_call.1} parent=0
    _
  %s8 = ssub.s32 1, %s6
  %s9 = scalar_select 0, %s8, %s6
  $region1: #{tpu_custom_call.1} parent=0
    #allocation2 [shape = 'u8[4096]{0}', space=vmem, size = 0x1000, scoped, tag = 'input window, operand 0, single buffered']
    #allocation3 [shape = 's32[1]{0}', space=sflag, size = 0x4, scoped, tag = 'scoped memory for tpu_custom_call.1']
    #allocation4 [shape = 's32[1]{0}', space=sflag, size = 0x4, scoped, tag = 'scoped memory for tpu_custom_call.1']
    #allocation5 [shape = 'u8[4096]{0}', space=vmem, size = 0x1000, scoped, tag = 'input window, operand 1, single buffered']
    #allocation6 [shape = 's32[1]{0}', space=sflag, size = 0x4, scoped, tag = 'scoped memory for tpu_custom_call.1']
    #allocation7 [shape = 'u8[65536]{0}', space=vmem, size = 0x10000, scoped, tag = 'input window, operand 2, single buffered']
    #allocation8 [shape = 'u8[65536]{0}', space=vmem, size = 0x10000, scoped, tag = 'input window, operand 3, single buffered']
    #allocation9 [shape = 's32[1]{0}', space=sflag, size = 0x4, scoped, tag = 'scoped memory for tpu_custom_call.1']
    #allocation10 [shape = 'u8[4096]{0}', space=vmem, size = 0x1000, scoped, tag = 'input window, operand 4, single buffered']
    #allocation11 [shape = 'u8[4096]{0}', space=vmem, size = 0x1000, scoped, tag = 'output window, operand 0, single buffered']
    %10 = vsyncpa [#allocation3], 0
    %11 = vsyncpa [#allocation6], 0
    %12 = vsyncpa [#allocation9], 0
    %13 = vsyncpa [#allocation4], 0
    // Predicated region
    $region2: #{tpu_custom_call.1} parent=1 // pred_check
      _
    $region3: #{tpu_custom_call.1} parent=1 // pred_check_branch
      %15 = sbr.rel (0) target = $region5
    $region4: #{tpu_custom_call.1} parent=1 // pred_region
      %s17 = ssub.s32 128, 128
      %18 = vsyncadd [#allocation3], %s17
      %s20 = sshll.u32 [#allocation2], 4
      %s21 = int_to_ptr.vmem [resolvable:$true] %s20
      %23 = dma.hbm_to_vmem [thread:$0]  %s0, 128, %s21, [#allocation3]
    $region5: #{tpu_custom_call.1} parent=1 // pred_fallthru
      _
    // Predicated region
    $region6: #{tpu_custom_call.1} parent=1 // pred_check
      _
    $region7: #{tpu_custom_call.1} parent=1 // pred_check_branch
      %25 = sbr.rel (0) target = $region9
    $region8: #{tpu_custom_call.1} parent=1 // pred_region
      %s27 = ssub.s32 128, 128
      %28 = vsyncadd [#allocation6], %s27
      %s30 = sshll.u32 [#allocation5], 4
      %s31 = int_to_ptr.vmem [resolvable:$true] %s30
      %33 = dma.hbm_to_vmem [thread:$0]  %s1, 128, %s31, [#allocation6]
    $region9: #{tpu_custom_call.1} parent=1 // pred_fallthru
      _
    // Predicated region
    $region10: #{tpu_custom_call.1} parent=1 // pred_check
      _
    $region11: #{tpu_custom_call.1} parent=1 // pred_check_branch
      %35 = sbr.rel (0) target = $region13
    $region12: #{tpu_custom_call.1} parent=1 // pred_region
      %s37 = ssub.s32 2048, 2048
      %38 = vsyncadd [#allocation6], %s37
      %s39 = sshll.u32 [#allocation7], 4
      %s40 = int_to_ptr.vmem [resolvable:$true] %s39
      %45 = dma.hbm_to_vmem [thread:$0]  %s2, 2048, %s40, [#allocation6], 128, 128, 8
    $region13: #{tpu_custom_call.1} parent=1 // pred_fallthru
      _
    // Predicated region
    $region14: #{tpu_custom_call.1} parent=1 // pred_check
      _
    $region15: #{tpu_custom_call.1} parent=1 // pred_check_branch
      %47 = sbr.rel (0) target = $region17
    $region16: #{tpu_custom_call.1} parent=1 // pred_region
      %s49 = ssub.s32 2048, 2048
      %50 = vsyncadd [#allocation9], %s49
      %s51 = sshll.u32 [#allocation8], 4
      %s52 = int_to_ptr.vmem [resolvable:$true] %s51
      %57 = dma.hbm_to_vmem [thread:$0]  %s3, 2048, %s52, [#allocation9], 128, 128, 8
    $region17: #{tpu_custom_call.1} parent=1 // pred_fallthru
      _
    // Predicated region
    $region18: #{tpu_custom_call.1} parent=1 // pred_check
      _
    $region19: #{tpu_custom_call.1} parent=1 // pred_check_branch
      %59 = sbr.rel (0) target = $region21
    $region20: #{tpu_custom_call.1} parent=1 // pred_region
      %s61 = ssub.s32 128, 128
      %62 = vsyncadd [#allocation9], %s61
      %s64 = sshll.u32 [#allocation10], 4
      %s65 = int_to_ptr.vmem [resolvable:$true] %s64
      %67 = dma.hbm_to_vmem [thread:$0]  %s4, 128, %s65, [#allocation9]
    $region21: #{tpu_custom_call.1} parent=1 // pred_fallthru
      _
    // Predicated region
    $region22: #{tpu_custom_call.1} parent=1 // pred_check
      _
    $region23: #{tpu_custom_call.1} parent=1 // pred_check_branch
      %69 = sbr.rel (0) target = $region25
    $region24: #{tpu_custom_call.1} parent=1 // pred_region
      %70 = dma.done [#allocation3], 128
    $region25: #{tpu_custom_call.1} parent=1 // pred_fallthru
      _
    // Predicated region
    $region26: #{tpu_custom_call.1} parent=1 // pred_check
      _
    $region27: #{tpu_custom_call.1} parent=1 // pred_check_branch
      %72 = sbr.rel (0) target = $region29
    $region28: #{tpu_custom_call.1} parent=1 // pred_region
      %73 = dma.done [#allocation6], 128
    $region29: #{tpu_custom_call.1} parent=1 // pred_fallthru
      _
    // Predicated region
    $region30: #{tpu_custom_call.1} parent=1 // pred_check
      _
    $region31: #{tpu_custom_call.1} parent=1 // pred_check_branch
      %75 = sbr.rel (0) target = $region33
    $region32: #{tpu_custom_call.1} parent=1 // pred_region
      %76 = dma.done [#allocation6], 2048
    $region33: #{tpu_custom_call.1} parent=1 // pred_fallthru
      _
    // Predicated region
    $region34: #{tpu_custom_call.1} parent=1 // pred_check
      _
    $region35: #{tpu_custom_call.1} parent=1 // pred_check_branch
      %78 = sbr.rel (0) target = $region37
    $region36: #{tpu_custom_call.1} parent=1 // pred_region
      %79 = dma.done [#allocation9], 2048
    $region37: #{tpu_custom_call.1} parent=1 // pred_fallthru
      _
    // Predicated region
    $region38: #{tpu_custom_call.1} parent=1 // pred_check
      _
    $region39: #{tpu_custom_call.1} parent=1 // pred_check_branch
      %81 = sbr.rel (0) target = $region41
    $region40: #{tpu_custom_call.1} parent=1 // pred_region
      %82 = dma.done [#allocation9], 128
    $region41: #{tpu_custom_call.1} parent=1 // pred_fallthru
      _
    %v83 = vld [vmem:[#allocation10] sm:$0xff]
    %v84 = vld [vmem:[#allocation2] sm:$0xff]
    %v85 = vld [vmem:[#allocation5] sm:$0xff]
    %v86 = vlaneseq
    %v87 = vshrl.u32 %v86, 7
    %v88 = vsub.s32 0, %v87
    %v89 = vrot.slane %v83, %v88
    %vm90 = vcmask 64512
    %v92 = vsel %vm90, %v84, 0
    %94 = vmatprep.subr.mxu0 0.0
    %95 = vmatpush1.msra.mxu0 0.0
    %96 = vmatprep.subr.mxu0 0.0
    %97 = vmatpush1.msra.mxu0 0.0
    %98 = vmatprep.subr.mxu0 0.0
    %99 = vmatpush1.msra.mxu0 0.0
    %100 = vmatprep.subr.mxu0 0.0
    %101 = vmatpush1.msra.mxu0 0.0
    %102 = vmatprep.subr.mxu0 0.0
    %103 = vmatpush1.msra.mxu0 0.0
    %104 = vmatprep.subr.mxu0 0.0
    %105 = vmatpush1.msra.mxu0 0.0
    %106 = vmatprep.subr.mxu0 0.0
    %107 = vmatpush1.msra.mxu0 0.0
    %108 = vmatprep.subr.mxu0 0.0
    %109 = vmatpush1.msra.mxu0 0.0
    %110 = vmatprep.subr.mxu0 0.0
    %111 = vmatpush1.msra.mxu0 0.0
    %112 = vmatprep.subr.mxu0 0.0
    %113 = vmatpush1.msra.mxu0 0.0
    %114 = vmatprep.subr.mxu0 0.0
    %115 = vmatpush1.msra.mxu0 0.0
    %116 = vmatprep.subr.mxu0 0.0
    %117 = vmatpush1.msra.mxu0 0.0
    %118 = vmatprep.subr.mxu0 0.0
    %119 = vmatpush1.msra.mxu0 0.0
    %120 = vmatprep.subr.mxu0 0.0
    %121 = vmatpush1.msra.mxu0 0.0
    %122 = vmatprep.subr.mxu0 0.0
    %123 = vmatpush1.msra.mxu0 0.0
    %124 = vmatprep.subr.mxu0 0.0
    %125 = vmatpush1.msra.mxu0 %v85
    %126 = vmatprep.subr.mxu0 0.0
    %127 = vmatpush2.msra.mxu0 0.0
    %128 = vmatprep.subr.mxu0 0.0
    %129 = vmatpush2.msra.mxu0 0.0
    %130 = vmatprep.subr.mxu0 0.0
    %131 = vmatpush2.msra.mxu0 0.0
    %132 = vmatprep.subr.mxu0 0.0
    %133 = vmatpush2.msra.mxu0 0.0
    %134 = vmatprep.subr.mxu0 0.0
    %135 = vmatpush2.msra.mxu0 0.0
    %136 = vmatprep.subr.mxu0 0.0
    %137 = vmatpush2.msra.mxu0 0.0
    %138 = vmatprep.subr.mxu0 0.0
    %139 = vmatpush2.msra.mxu0 0.0
    %140 = vmatprep.subr.mxu0 0.0
    %141 = vmatpush2.msra.mxu0 0.0
    %142 = vmatprep.subr.mxu0 0.0
    %143 = vmatpush2.msra.mxu0 0.0
    %144 = vmatprep.subr.mxu0 0.0
    %145 = vmatpush2.msra.mxu0 0.0
    %146 = vmatprep.subr.mxu0 0.0
    %147 = vmatpush2.msra.mxu0 0.0
    %148 = vmatprep.subr.mxu0 0.0
    %149 = vmatpush2.msra.mxu0 0.0
    %150 = vmatprep.subr.mxu0 0.0
    %151 = vmatpush2.msra.mxu0 0.0
    %152 = vmatprep.subr.mxu0 0.0
    %153 = vmatpush2.msra.mxu0 0.0
    %154 = vmatprep.subr.mxu0 0.0
    %155 = vmatpush2.msra.mxu0 0.0
    %156 = vmatprep.subr.mxu0 0.0
    %157 = vmatpush2.msra.mxu0 0.0
    %158 = vmatprep.mubr.f32.mxu0 0.0
    %159 = vmatmul.mubr.f32.gmra.mxu0 %v92
    %v160 = vpop.f32.mrf.mxu0
    %v161 = vadd.f32 %v89, %v160
    %v162 = vpop.f32.mrf.mxu0
    %163 = vdwg.mxu0
    %v164 = vmax.f32 %v161, 0.0
    %v165 = vld [vmem:[#allocation7] sm:$0xff]
    %v166 = vld [vmem:[#allocation7 + $0x8] sm:$0xff]
    %v167 = vld [vmem:[#allocation7 + $0x10] sm:$0xff]
    %v168 = vld [vmem:[#allocation7 + $0x18] sm:$0xff]
    %v169 = vld [vmem:[#allocation7 + $0x20] sm:$0xff]
    %v170 = vld [vmem:[#allocation7 + $0x28] sm:$0xff]
    %v171 = vld [vmem:[#allocation7 + $0x30] sm:$0xff]
    %v172 = vld [vmem:[#allocation7 + $0x38] sm:$0xff]
    %v173 = vld [vmem:[#allocation7 + $0x40] sm:$0xff]
    %v174 = vld [vmem:[#allocation7 + $0x48] sm:$0xff]
    %v175 = vld [vmem:[#allocation7 + $0x50] sm:$0xff]
    %v176 = vld [vmem:[#allocation7 + $0x58] sm:$0xff]
    %v177 = vld [vmem:[#allocation7 + $0x60] sm:$0xff]
    %v178 = vld [vmem:[#allocation7 + $0x68] sm:$0xff]
    %v179 = vld [vmem:[#allocation7 + $0x70] sm:$0xff]
    %v180 = vld [vmem:[#allocation7 + $0x78] sm:$0xff]
    %v181 = vlaneseq
    %v182 = vshrl.u32 %v181, 7
    %v183 = vsub.s32 1, %v182
    %v184 = vrot.slane %v83, %v183
    %185 = vmatprep.subr.mxu0 0.0
    %186 = vmatpush1.msra.mxu0 %v180
    %187 = vmatprep.subr.mxu0 0.0
    %188 = vmatpush1.msra.mxu0 %v179
    %189 = vmatprep.subr.mxu0 0.0
    %190 = vmatpush1.msra.mxu0 %v178
    %191 = vmatprep.subr.mxu0 0.0
    %192 = vmatpush1.msra.mxu0 %v177
    %193 = vmatprep.subr.mxu0 0.0
    %194 = vmatpush1.msra.mxu0 %v176
    %195 = vmatprep.subr.mxu0 0.0
    %196 = vmatpush1.msra.mxu0 %v175
    %197 = vmatprep.subr.mxu0 0.0
    %198 = vmatpush1.msra.mxu0 %v174
    %199 = vmatprep.subr.mxu0 0.0
    %200 = vmatpush1.msra.mxu0 %v173
    %201 = vmatprep.subr.mxu0 0.0
    %202 = vmatpush1.msra.mxu0 %v172
    %203 = vmatprep.subr.mxu0 0.0
    %204 = vmatpush1.msra.mxu0 %v171
    %205 = vmatprep.subr.mxu0 0.0
    %206 = vmatpush1.msra.mxu0 %v170
    %207 = vmatprep.subr.mxu0 0.0
    %208 = vmatpush1.msra.mxu0 %v169
    %209 = vmatprep.subr.mxu0 0.0
    %210 = vmatpush1.msra.mxu0 %v168
    %211 = vmatprep.subr.mxu0 0.0
    %212 = vmatpush1.msra.mxu0 %v167
    %213 = vmatprep.subr.mxu0 0.0
    %214 = vmatpush1.msra.mxu0 %v166
    %215 = vmatprep.subr.mxu0 0.0
    %216 = vmatpush1.msra.mxu0 %v165
    %217 = vmatprep.subr.mxu0 0.0
    %218 = vmatpush2.msra.mxu0 0.0
    %219 = vmatprep.subr.mxu0 0.0
    %220 = vmatpush2.msra.mxu0 0.0
    %221 = vmatprep.subr.mxu0 0.0
    %222 = vmatpush2.msra.mxu0 0.0
    %223 = vmatprep.subr.mxu0 0.0
    %224 = vmatpush2.msra.mxu0 0.0
    %225 = vmatprep.subr.mxu0 0.0
    %226 = vmatpush2.msra.mxu0 0.0
    %227 = vmatprep.subr.mxu0 0.0
    %228 = vmatpush2.msra.mxu0 0.0
    %229 = vmatprep.subr.mxu0 0.0
    %230 = vmatpush2.msra.mxu0 0.0
    %231 = vmatprep.subr.mxu0 0.0
    %232 = vmatpush2.msra.mxu0 0.0
    %233 = vmatprep.subr.mxu0 0.0
    %234 = vmatpush2.msra.mxu0 0.0
    %235 = vmatprep.subr.mxu0 0.0
    %236 = vmatpush2.msra.mxu0 0.0
    %237 = vmatprep.subr.mxu0 0.0
    %238 = vmatpush2.msra.mxu0 0.0
    %239 = vmatprep.subr.mxu0 0.0
    %240 = vmatpush2.msra.mxu0 0.0
    %241 = vmatprep.subr.mxu0 0.0
    %242 = vmatpush2.msra.mxu0 0.0
    %243 = vmatprep.subr.mxu0 0.0
    %244 = vmatpush2.msra.mxu0 0.0
    %245 = vmatprep.subr.mxu0 0.0
    %246 = vmatpush2.msra.mxu0 0.0
    %247 = vmatprep.subr.mxu0 0.0
    %248 = vmatpush2.msra.mxu0 0.0
    %249 = vmatprep.mubr.f32.mxu0 0.0
    %250 = vmatmul.mubr.f32.gmra.mxu0 %v164
    %v251 = vpop.f32.mrf.mxu0
    %v252 = vadd.f32 %v184, %v251
    %v253 = vpop.f32.mrf.mxu0
    %254 = vdwg.mxu0
    %v255 = vmax.f32 %v252, 0.0
    %v256 = vld [vmem:[#allocation8] sm:$0xff]
    %v257 = vld [vmem:[#allocation8 + $0x8] sm:$0xff]
    %v258 = vld [vmem:[#allocation8 + $0x10] sm:$0xff]
    %v259 = vld [vmem:[#allocation8 + $0x18] sm:$0xff]
    %v260 = vld [vmem:[#allocation8 + $0x20] sm:$0xff]
    %v261 = vld [vmem:[#allocation8 + $0x28] sm:$0xff]
    %v262 = vld [vmem:[#allocation8 + $0x30] sm:$0xff]
    %v263 = vld [vmem:[#allocation8 + $0x38] sm:$0xff]
    %v264 = vld [vmem:[#allocation8 + $0x40] sm:$0xff]
    %v265 = vld [vmem:[#allocation8 + $0x48] sm:$0xff]
    %v266 = vld [vmem:[#allocation8 + $0x50] sm:$0xff]
    %v267 = vld [vmem:[#allocation8 + $0x58] sm:$0xff]
    %v268 = vld [vmem:[#allocation8 + $0x60] sm:$0xff]
    %v269 = vld [vmem:[#allocation8 + $0x68] sm:$0xff]
    %v270 = vld [vmem:[#allocation8 + $0x70] sm:$0xff]
    %v271 = vld [vmem:[#allocation8 + $0x78] sm:$0xff]
    %v272 = vlaneseq
    %v273 = vshrl.u32 %v272, 7
    %v274 = vsub.s32 2, %v273
    %v275 = vrot.slane %v83, %v274
    %276 = vmatprep.subr.mxu0 0.0
    %277 = vmatpush1.msra.mxu0 %v271
    %278 = vmatprep.subr.mxu0 0.0
    %279 = vmatpush1.msra.mxu0 %v270
    %280 = vmatprep.subr.mxu0 0.0
    %281 = vmatpush1.msra.mxu0 %v269
    %282 = vmatprep.subr.mxu0 0.0
    %283 = vmatpush1.msra.mxu0 %v268
    %284 = vmatprep.subr.mxu0 0.0
    %285 = vmatpush1.msra.mxu0 %v267
    %286 = vmatprep.subr.mxu0 0.0
    %287 = vmatpush1.msra.mxu0 %v266
    %288 = vmatprep.subr.mxu0 0.0
    %289 = vmatpush1.msra.mxu0 %v265
    %290 = vmatprep.subr.mxu0 0.0
    %291 = vmatpush1.msra.mxu0 %v264
    %292 = vmatprep.subr.mxu0 0.0
    %293 = vmatpush1.msra.mxu0 %v263
    %294 = vmatprep.subr.mxu0 0.0
    %295 = vmatpush1.msra.mxu0 %v262
    %296 = vmatprep.subr.mxu0 0.0
    %297 = vmatpush1.msra.mxu0 %v261
    %298 = vmatprep.subr.mxu0 0.0
    %299 = vmatpush1.msra.mxu0 %v260
    %300 = vmatprep.subr.mxu0 0.0
    %301 = vmatpush1.msra.mxu0 %v259
    %302 = vmatprep.subr.mxu0 0.0
    %303 = vmatpush1.msra.mxu0 %v258
    %304 = vmatprep.subr.mxu0 0.0
    %305 = vmatpush1.msra.mxu0 %v257
    %306 = vmatprep.subr.mxu0 0.0
    %307 = vmatpush1.msra.mxu0 %v256
    %308 = vmatprep.subr.mxu0 0.0
    %309 = vmatpush2.msra.mxu0 0.0
    %310 = vmatprep.subr.mxu0 0.0
    %311 = vmatpush2.msra.mxu0 0.0
    %312 = vmatprep.subr.mxu0 0.0
    %313 = vmatpush2.msra.mxu0 0.0
    %314 = vmatprep.subr.mxu0 0.0
    %315 = vmatpush2.msra.mxu0 0.0
    %316 = vmatprep.subr.mxu0 0.0
    %317 = vmatpush2.msra.mxu0 0.0
    %318 = vmatprep.subr.mxu0 0.0
    %319 = vmatpush2.msra.mxu0 0.0
    %320 = vmatprep.subr.mxu0 0.0
    %321 = vmatpush2.msra.mxu0 0.0
    %322 = vmatprep.subr.mxu0 0.0
    %323 = vmatpush2.msra.mxu0 0.0
    %324 = vmatprep.subr.mxu0 0.0
    %325 = vmatpush2.msra.mxu0 0.0
    %326 = vmatprep.subr.mxu0 0.0
    %327 = vmatpush2.msra.mxu0 0.0
    %328 = vmatprep.subr.mxu0 0.0
    %329 = vmatpush2.msra.mxu0 0.0
    %330 = vmatprep.subr.mxu0 0.0
    %331 = vmatpush2.msra.mxu0 0.0
    %332 = vmatprep.subr.mxu0 0.0
    %333 = vmatpush2.msra.mxu0 0.0
    %334 = vmatprep.subr.mxu0 0.0
    %335 = vmatpush2.msra.mxu0 0.0
    %336 = vmatprep.subr.mxu0 0.0
    %337 = vmatpush2.msra.mxu0 0.0
    %338 = vmatprep.subr.mxu0 0.0
    %339 = vmatpush2.msra.mxu0 0.0
    %340 = vmatprep.mubr.f32.mxu0 0.0
    %341 = vmatmul.mubr.f32.gmra.mxu0 %v255
    %v342 = vpop.f32.mrf.mxu0
    %v343 = vadd.f32 %v275, %v342
    %v344 = vpop.f32.mrf.mxu0
    %345 = vdwg.mxu0
    %346 = vst [vmem:[#allocation11] sm:$0xff] %v343
    // Predicated region
    $region42: #{tpu_custom_call.1} parent=1 // pred_check
      _
    $region43: #{tpu_custom_call.1} parent=1 // pred_check_branch
      %348 = sbr.rel (0) target = $region45
    $region44: #{tpu_custom_call.1} parent=1 // pred_region
      %s350 = ssub.s32 128, 128
      %351 = vsyncadd [#allocation4], %s350
      %s353 = sshll.u32 [#allocation11], 4
      %s354 = int_to_ptr.vmem [resolvable:$true] %s353
      %356 = dma.vmem_to_hbm [thread:$0]  %s354, 128, %s5, [#allocation4]
    $region45: #{tpu_custom_call.1} parent=1 // pred_fallthru
      _
    // Predicated region
    $region46: #{tpu_custom_call.1} parent=1 // pred_check
      _
    $region47: #{tpu_custom_call.1} parent=1 // pred_check_branch
      %358 = sbr.rel (0) target = $region49
    $region48: #{tpu_custom_call.1} parent=1 // pred_region
      %359 = dma.done [#allocation4], 128
    $region49: #{tpu_custom_call.1} parent=1 // pred_fallthru
      _
    %360 = vsyncpa [#allocation3], 1
    %361 = vsyncpa [#allocation6], 1
    %362 = vsyncpa [#allocation9], 1
    %363 = vsyncpa [#allocation4], 1

</llo_original>
